<compile_context>
chip_gen: v7x
topology: tpu7x:2x2x1
jax: 0.10.0
libtpu: 0.0.40
codegen_flags: <defaults>
</compile_context>

<pallas_src>
import math

import jax
import jax.numpy as jnp
from jax.experimental import pallas as pl
from jax.experimental.pallas import tpu as pltpu


_MASK_NEG = -1e30  # fill value of the standard BiDAF masked_softmax


def _round_up(a, b):
    return -(-a // b) * b


# ---------------------------------------------------------------------------
# Kernels
# ---------------------------------------------------------------------------

def _channel_reduce(w_ref, m1_ref, m2_ref, m3_ref):
    """1x1 conv over the (virtually) concatenated channel dim, f32 accumulation.

    Sequential accumulation keeps only one (tb, H, tl) f32 temporary live at a
    time (bounds VMEM temporaries / vreg pressure at large tiles).
    """
    w = w_ref[...]                                                     # (3, H, 1) f32, resident
    logits = jnp.sum(m1_ref[...].astype(jnp.float32) * w[0][None], axis=1)
    logits = logits + jnp.sum(m2_ref[...].astype(jnp.float32) * w[1][None], axis=1)
    logits = logits + jnp.sum(m3_ref[...].astype(jnp.float32) * w[2][None], axis=1)
    return logits                                                      # (tb, tl) f32


def _fv_kernel_single(w_ref, m1_ref, m2_ref, m3_ref, mask_ref, o_ref):
    """Whole sequence in one tile: plain masked softmax, no carries/scratch."""
    logits = _channel_reduce(w_ref, m1_ref, m2_ref, m3_ref)
    s = jnp.where(mask_ref[...] != 0, logits, _MASK_NEG)
    m = jnp.max(s, axis=-1, keepdims=True)
    z = jnp.sum(jnp.exp(s - m), axis=-1, keepdims=True)
    # p_l = exp(s_l - m)/z ; max_l p_l = 1/z  =>  y = (1 - exp(s0 - m)) / z
    y = (1.0 - jnp.exp(s[:, 0:1] - m)) / z
    o_ref[...] = y.astype(o_ref.dtype)


def _fv_kernel_tiled(w_ref, m1_ref, m2_ref, m3_ref, mask_ref, o_ref,
                     m_sc, z_sc, s0_sc):
    """Sequence split over grid axis 1: online (flash-style) softmax carry."""
    il = pl.program_id(1)
    nl = pl.num_programs(1)

    logits = _channel_reduce(w_ref, m1_ref, m2_ref, m3_ref)
    s = jnp.where(mask_ref[...] != 0, logits, _MASK_NEG)

    @pl.when(il == 0)
    def _():
        m_sc[...] = jnp.full_like(m_sc, -jnp.inf)
        z_sc[...] = jnp.zeros_like(z_sc)
        s0_sc[...] = s[:, 0:1]                     # masked logit at global l == 0

    m_prev = m_sc[...]
    m_new = jnp.maximum(m_prev, jnp.max(s, axis=-1, keepdims=True))
    z_sc[...] = z_sc[...] * jnp.exp(m_prev - m_new) + \
        jnp.sum(jnp.exp(s - m_new), axis=-1, keepdims=True)
    m_sc[...] = m_new

    @pl.when(il == nl - 1)
    def _():
        y = (1.0 - jnp.exp(s0_sc[...] - m_sc[...])) / z_sc[...]
        o_ref[...] = y.astype(o_ref.dtype)


# ---------------------------------------------------------------------------
# Wrapper
# ---------------------------------------------------------------------------

def _vmem_capacity_bytes():
    try:
        info = pltpu.get_tpu_info()
        cap = int(getattr(info, "vmem_capacity_bytes", 0) or 0)
        if cap > 0:
            return cap
    except Exception:
        pass
    return 64 << 20  # conservative default (v7x physical VMEM per TensorCore)


def _vmem_need_bytes(tb, H, tl, in_itemsize):
    """Rough per-step VMEM estimate: double-buffered inputs + live f32 temporaries."""
    inputs = 3 * tb * H * tl * in_itemsize + tb * tl          # M1/M2/M3 + int8 mask
    dbl = 2 * inputs                                           # BlockSpec double-buffers
    temps = 2 * tb * H * tl * 4                                # one f32 cast + one product live
    misc = 6 * tb * tl * 4 + 3 * H * 4 + (64 << 10)
    return dbl + temps + misc


def fv_forward(M1, M2, M3, mask, wx_weight, *, tb=None, tl=None):
    """FV forward.

    M1, M2, M3 : (B, H, L)     Conv1d layout (channels dim = 1); any float dtype
                               (bf16 recommended — do NOT pre-cast to f32).
    mask       : (B, L)        1 = keep, 0 = masked out (bool / int / float)
    wx_weight  : (1, 3*H, 1)   Conv1d weight of Wx (kernel_size=1, bias=False)
    returns    : (B,) float32
    """
    B, H, L = M1.shape
    assert M2.shape == (B, H, L) and M3.shape == (B, H, L)
    assert mask.shape == (B, L)
    assert wx_weight.shape == (1, 3 * H, 1)
    # NOTE: like torch, a B==1 input is still treated as a batch of 1 (no squeeze-to-1D).

    # Small resident weight (fuses torch.cat into the kernel); f32 is fine (tiny).
    w = jnp.asarray(wx_weight, jnp.float32).reshape(3, H, 1)
    # Mask as int8 -> 4x fewer mask bytes and a single select in the kernel.
    mask_i8 = (jnp.asarray(mask) != 0).astype(jnp.int8)
    in_itemsize = jnp.dtype(M1.dtype).itemsize

    vmem_cap = _vmem_capacity_bytes()
    budget = int(vmem_cap * 0.6)                 # headroom for scratch / compiler temporaries
    vmem_limit = max(min(int(vmem_cap * 0.8), vmem_cap - (8 << 20)), 32 << 20)

    # ---- batch tile (sublane-aligned; >= 2 tiles for big batches -> both v7x TCs) ----
    if tb is None:
        tb = 8
    if B <= tb:
        tb = B
    else:
        tb = max(8, (tb // 8) * 8)
        half = _round_up(B, 8) // 2
        if B >= 16 and tb > half:
            tb = max(8, (half // 8) * 8)
    B_pad = _round_up(B, tb)

    # ---- sequence tile: prefer one full-L tile if it fits the VMEM budget ----
    if tl is None:
        if _vmem_need_bytes(tb, H, L, in_itemsize) <= budget:
            tl = L
        else:
            tl = 128
            L128 = _round_up(L, 128)
            while (tl + 128 < L128
                   and _vmem_need_bytes(tb, H, tl + 128, in_itemsize) <= budget):
                tl += 128
    else:
        tl = L if tl >= L else max(128, (tl // 128) * 128)

    single = tl >= L
    if single:
        tl = L
        L_pad = L
    else:
        L_pad = _round_up(L, tl)

    # ---- ragged-shape padding (pads count as masked-out; no divisibility asserts) ----
    pb, pL = B_pad - B, L_pad - L
    if pb or pL:
        pad3 = ((0, pb), (0, 0), (0, pL))
        M1 = jnp.pad(M1, pad3)
        M2 = jnp.pad(M2, pad3)
        M3 = jnp.pad(M3, pad3)
        mask_i8 = jnp.pad(mask_i8, ((0, pb), (0, pL)))

    nb = B_pad // tb

    if single:
        out = pl.pallas_call(
            _fv_kernel_single,
            out_shape=jax.ShapeDtypeStruct((B_pad, 1), jnp.float32),
            grid_spec=pltpu.PrefetchScalarGridSpec(
                num_scalar_prefetch=0,
                grid=(nb,),
                in_specs=[
                    pl.BlockSpec((3, H, 1), lambda ib: (0, 0, 0)),       # weight (resident)
                    pl.BlockSpec((tb, H, L_pad), lambda ib: (ib, 0, 0)),  # M1
                    pl.BlockSpec((tb, H, L_pad), lambda ib: (ib, 0, 0)),  # M2
                    pl.BlockSpec((tb, H, L_pad), lambda ib: (ib, 0, 0)),  # M3
                    pl.BlockSpec((tb, L_pad), lambda ib: (ib, 0)),        # mask (int8)
                ],
                out_specs=pl.BlockSpec((tb, 1), lambda ib: (ib, 0)),
            ),
            compiler_params=pltpu.CompilerParams(
                dimension_semantics=("parallel",),
                vmem_limit_bytes=int(vmem_limit)),
        )(w, M1, M2, M3, mask_i8)
    else:
        nl = L_pad // tl
        out = pl.pallas_call(
            _fv_kernel_tiled,
            out_shape=jax.ShapeDtypeStruct((B_pad, 1), jnp.float32),
            grid_spec=pltpu.PrefetchScalarGridSpec(
                num_scalar_prefetch=0,
                grid=(nb, nl),
                in_specs=[
                    pl.BlockSpec((3, H, 1), lambda ib, il: (0, 0, 0)),       # weight (resident)
                    pl.BlockSpec((tb, H, tl), lambda ib, il: (ib, 0, il)),   # M1
                    pl.BlockSpec((tb, H, tl), lambda ib, il: (ib, 0, il)),   # M2
                    pl.BlockSpec((tb, H, tl), lambda ib, il: (ib, 0, il)),   # M3
                    pl.BlockSpec((tb, tl), lambda ib, il: (ib, il)),         # mask (int8)
                ],
                out_specs=pl.BlockSpec((tb, 1), lambda ib, il: (ib, 0)),
                scratch_shapes=[pltpu.VMEM((tb, 1), jnp.float32)] * 3,       # m, z, s0
            ),
            compiler_params=pltpu.CompilerParams(
                dimension_semantics=("parallel", "arbitrary"),
                vmem_limit_bytes=int(vmem_limit)),
        )(w, M1, M2, M3, mask_i8)

    return out[:B, 0]


# ---------------------------------------------------------------------------
# Self-test
# ---------------------------------------------------------------------------

def _reference(M1, M2, M3, mask, wx):
    xcat = jnp.concatenate([M1, M2, M3], axis=1).astype(jnp.float32)   # (B, 3H, L)
    logits = jnp.einsum('bcl,c->bl', xcat, wx[0, :, 0].astype(jnp.float32))
    masked = jnp.where(mask != 0, logits, _MASK_NEG)
    p = jax.nn.softmax(masked, axis=-1)
    return jnp.max(p - p[:, 0:1], axis=-1).astype(jnp.float32)


if __name__ == "__main__":
    # Small shapes consistent with the module's forward (Conv1d layout).
    B, hidden_size, L = 2, 32, 160
    H = hidden_size

    key = jax.random.PRNGKey(0)
    k1, k2, k3, kw = jax.random.split(key, 4)
    M1 = jax.random.normal(k1, (B, H, L), dtype=jnp.float32)
    M2 = jax.random.normal(k2, (B, H, L), dtype=jnp.float32)
    M3 = jax.random.normal(k3, (B, H, L), dtype=jnp.float32)

    # Xavier-uniform-ish init for the (1, 3H, 1) Conv1d weight of Wx.
    bound = math.sqrt(6.0 / (3 * H + 1))
    wx = jax.random.uniform(kw, (1, 3 * H, 1), dtype=jnp.float32,
                            minval=-bound, maxval=bound)

    # Per-row valid lengths -> 0/1 mask.
    lengths = jnp.array([150, 100], dtype=jnp.int32)
    mask = (jnp.arange(L)[None, :] < lengths[:, None]).astype(jnp.float32)

    y_ref = _reference(M1, M2, M3, mask, wx)

    # 1) Auto tiles: single full-L sequence tile (no online-softmax carry).
    y1 = jax.block_until_ready(fv_forward(M1, M2, M3, mask, wx))
    assert y1.shape == (B,)
    assert jnp.allclose(y1, y_ref, atol=1e-5, rtol=1e-4), (y1, y_ref)

    # 2) Forced small seq tile: exercises the tiled / online-softmax reduction path
    #    (L=160 -> padded to 256, 2 seq steps).
    y2 = jax.block_until_ready(fv_forward(M1, M2, M3, mask, wx, tl=128))
    assert jnp.allclose(y2, y_ref, atol=1e-5, rtol=1e-4), (y2, y_ref)

    # 3) bf16 inputs (half the HBM bytes); accumulation stays f32 inside the kernel.
    M1b, M2b, M3b = (M1.astype(jnp.bfloat16), M2.astype(jnp.bfloat16),
                     M3.astype(jnp.bfloat16))
    y3 = jax.block_until_ready(fv_forward(M1b, M2b, M3b, mask, wx))
    y_ref_b = _reference(M1b, M2b, M3b, mask, wx)
    assert jnp.allclose(y3, y_ref_b, atol=1e-3, rtol=1e-2), (y3, y_ref_b)

    print("KERNEL_OK")
</pallas_src>

<mosaic_0001>
module attributes {stable_mosaic.version = 11 : i64} {
  func.func @_fv_kernel_single(%arg0: i32, %arg1: memref<3x32x1xf32, #tpu.memory_space<vmem>>, %arg2: memref<2x32x160xf32, #tpu.memory_space<vmem>>, %arg3: memref<2x32x160xf32, #tpu.memory_space<vmem>>, %arg4: memref<2x32x160xf32, #tpu.memory_space<vmem>>, %arg5: memref<2x160xi8, #tpu.memory_space<vmem>>, %arg6: memref<2x1xf32, #tpu.memory_space<vmem>>) attributes {dimension_semantics = [#tpu.dimension_semantics<parallel>], iteration_bounds = array<i64: 1>, scalar_prefetch = 0 : i64, scratch_operands = 0 : i64, tpu.core_type = #tpu.core_type<tc>, window_params = [{pipeline_mode = #tpu.pipeline_mode<synchronous>, transform_indices = @transform_0, window_bounds = array<i64: 3, 32, 1>}, {transform_indices = @transform_1, window_bounds = array<i64: 2, 32, 160>}, {transform_indices = @transform_2, window_bounds = array<i64: 2, 32, 160>}, {transform_indices = @transform_3, window_bounds = array<i64: 2, 32, 160>}, {transform_indices = @transform_4, window_bounds = array<i64: 2, 160>}, {transform_indices = @transform_5, window_bounds = array<i64: 2, 1>}]} {
    %c0 = arith.constant 0 : index
    %c0_0 = arith.constant 0 : index
    %c0_1 = arith.constant 0 : index
    %0 = vector.load %arg1[%c0, %c0_0, %c0_1] : memref<3x32x1xf32, #tpu.memory_space<vmem>>, vector<3x32x1xf32>
    %c0_2 = arith.constant 0 : index
    %c0_3 = arith.constant 0 : index
    %c0_4 = arith.constant 0 : index
    %1 = vector.load %arg2[%c0_2, %c0_3, %c0_4] : memref<2x32x160xf32, #tpu.memory_space<vmem>>, vector<2x32x160xf32>
    %2 = vector.extract_strided_slice %0 {offsets = [0, 0, 0], sizes = [1, 32, 1], strides = [1, 1, 1]} : vector<3x32x1xf32> to vector<1x32x1xf32>
    %3 = vector.shape_cast %2 : vector<1x32x1xf32> to vector<32x1xf32>
    %4 = vector.shape_cast %3 : vector<32x1xf32> to vector<1x32x1xf32>
    %5 = vector.broadcast %4 : vector<1x32x1xf32> to vector<2x32x160xf32>
    %6 = arith.mulf %1, %5 : vector<2x32x160xf32>
    %cst = arith.constant dense<0.000000e+00> : vector<2x160xf32>
    %7 = vector.multi_reduction <add>, %6, %cst [1] : vector<2x32x160xf32> to vector<2x160xf32>
    %c0_5 = arith.constant 0 : index
    %c0_6 = arith.constant 0 : index
    %c0_7 = arith.constant 0 : index
    %8 = vector.load %arg3[%c0_5, %c0_6, %c0_7] : memref<2x32x160xf32, #tpu.memory_space<vmem>>, vector<2x32x160xf32>
    %9 = vector.extract_strided_slice %0 {offsets = [1, 0, 0], sizes = [1, 32, 1], strides = [1, 1, 1]} : vector<3x32x1xf32> to vector<1x32x1xf32>
    %10 = vector.shape_cast %9 : vector<1x32x1xf32> to vector<32x1xf32>
    %11 = vector.shape_cast %10 : vector<32x1xf32> to vector<1x32x1xf32>
    %12 = vector.broadcast %11 : vector<1x32x1xf32> to vector<2x32x160xf32>
    %13 = arith.mulf %8, %12 : vector<2x32x160xf32>
    %cst_8 = arith.constant dense<0.000000e+00> : vector<2x160xf32>
    %14 = vector.multi_reduction <add>, %13, %cst_8 [1] : vector<2x32x160xf32> to vector<2x160xf32>
    %15 = arith.addf %7, %14 : vector<2x160xf32>
    %c0_9 = arith.constant 0 : index
    %c0_10 = arith.constant 0 : index
    %c0_11 = arith.constant 0 : index
    %16 = vector.load %arg4[%c0_9, %c0_10, %c0_11] : memref<2x32x160xf32, #tpu.memory_space<vmem>>, vector<2x32x160xf32>
    %17 = vector.extract_strided_slice %0 {offsets = [2, 0, 0], sizes = [1, 32, 1], strides = [1, 1, 1]} : vector<3x32x1xf32> to vector<1x32x1xf32>
    %18 = vector.shape_cast %17 : vector<1x32x1xf32> to vector<32x1xf32>
    %19 = vector.shape_cast %18 : vector<32x1xf32> to vector<1x32x1xf32>
    %20 = vector.broadcast %19 : vector<1x32x1xf32> to vector<2x32x160xf32>
    %21 = arith.mulf %16, %20 : vector<2x32x160xf32>
    %cst_12 = arith.constant dense<0.000000e+00> : vector<2x160xf32>
    %22 = vector.multi_reduction <add>, %21, %cst_12 [1] : vector<2x32x160xf32> to vector<2x160xf32>
    %23 = arith.addf %15, %22 : vector<2x160xf32>
    %c0_13 = arith.constant 0 : index
    %c0_14 = arith.constant 0 : index
    %24 = vector.load %arg5[%c0_13, %c0_14] : memref<2x160xi8, #tpu.memory_space<vmem>>, vector<2x160xi8>
    %c0_i8 = arith.constant 0 : i8
    %25 = vector.broadcast %c0_i8 : i8 to vector<2x160xi8>
    %26 = arith.cmpi ne, %24, %25 : vector<2x160xi8>
    %cst_15 = arith.constant -1.000000e+30 : f32
    %27 = vector.broadcast %cst_15 : f32 to vector<2x160xf32>
    %28 = arith.select %26, %23, %27 : vector<2x160xi1>, vector<2x160xf32>
    %cst_16 = arith.constant dense<0xFF800000> : vector<2xf32>
    %29 = vector.multi_reduction <maximumf>, %28, %cst_16 [1] : vector<2x160xf32> to vector<2xf32>
    %30 = vector.shape_cast %29 : vector<2xf32> to vector<2x1xf32>
    %31 = vector.broadcast %30 : vector<2x1xf32> to vector<2x160xf32>
    %32 = arith.subf %28, %31 : vector<2x160xf32>
    %33 = math.exp %32 : vector<2x160xf32>
    %cst_17 = arith.constant dense<0.000000e+00> : vector<2xf32>
    %34 = vector.multi_reduction <add>, %33, %cst_17 [1] : vector<2x160xf32> to vector<2xf32>
    %35 = vector.shape_cast %34 : vector<2xf32> to vector<2x1xf32>
    %36 = vector.extract_strided_slice %28 {offsets = [0, 0], sizes = [2, 1], strides = [1, 1]} : vector<2x160xf32> to vector<2x1xf32>
    %37 = arith.subf %36, %30 : vector<2x1xf32>
    %38 = math.exp %37 : vector<2x1xf32>
    %cst_18 = arith.constant 1.000000e+00 : f32
    %39 = vector.broadcast %cst_18 : f32 to vector<2x1xf32>
    %40 = arith.subf %39, %38 : vector<2x1xf32>
    %41 = arith.divf %40, %35 : vector<2x1xf32>
    %c0_19 = arith.constant 0 : index
    %c0_20 = arith.constant 0 : index
    %42 = vector.load %arg6[%c0_19, %c0_20] : memref<2x1xf32, #tpu.memory_space<vmem>>, vector<2x1xf32>
    tpu.vector_store %arg6[%c0_19, %c0_20], %41 {strides = array<i32>} : memref<2x1xf32, #tpu.memory_space<vmem>>, vector<2x1xf32>,
    return
  }
  func.func @transform_0(%arg0: i32) -> (i32, i32, i32) {
    %c0_i32 = arith.constant 0 : i32
    %c0_i32_0 = arith.constant 0 : i32
    %c0_i32_1 = arith.constant 0 : i32
    %c0_i32_2 = arith.constant 0 : i32
    return %c0_i32, %c0_i32_0, %c0_i32_1 : i32, i32, i32
  }
  func.func @transform_1(%arg0: i32) -> (i32, i32, i32) {
    %c0_i32 = arith.constant 0 : i32
    %c0_i32_0 = arith.constant 0 : i32
    %c0_i32_1 = arith.constant 0 : i32
    return %arg0, %c0_i32, %c0_i32_0 : i32, i32, i32
  }
  func.func @transform_2(%arg0: i32) -> (i32, i32, i32) {
    %c0_i32 = arith.constant 0 : i32
    %c0_i32_0 = arith.constant 0 : i32
    %c0_i32_1 = arith.constant 0 : i32
    return %arg0, %c0_i32, %c0_i32_0 : i32, i32, i32
  }
  func.func @transform_3(%arg0: i32) -> (i32, i32, i32) {
    %c0_i32 = arith.constant 0 : i32
    %c0_i32_0 = arith.constant 0 : i32
    %c0_i32_1 = arith.constant 0 : i32
    return %arg0, %c0_i32, %c0_i32_0 : i32, i32, i32
  }
  func.func @transform_4(%arg0: i32) -> (i32, i32) {
    %c0_i32 = arith.constant 0 : i32
    %c0_i32_0 = arith.constant 0 : i32
    return %arg0, %c0_i32 : i32, i32
  }
  func.func @transform_5(%arg0: i32) -> (i32, i32) {
    %c0_i32 = arith.constant 0 : i32
    %c0_i32_0 = arith.constant 0 : i32
    return %arg0, %c0_i32 : i32, i32
  }
}

</mosaic_0001>

<llo_original>
// kernel: tpu_custom_call.1
$region0: #{tpu_custom_call.1}
  #allocation0 [shape = 'u32[]', space=smem, size = 0x4, offset = 0x4, fixed_abs, tag = 'smem constant byte address 0x4 - core index']
  #allocation1 [shape = 'u32[144,128]{1,0:T(1,128)}', space=vmem, size = 0x12000, scoped, tag = 'internal scratch']
  %s0 = inlined_call_operand.vmem [shape: f32[3,32,1], index: 0, kind: input, shape index: {}]
  %s1 = inlined_call_operand.hbm [shape: f32[2,32,160], index: 1, kind: input, shape index: {}]
  %s2 = inlined_call_operand.hbm [shape: f32[2,32,160], index: 2, kind: input, shape index: {}]
  %s3 = inlined_call_operand.hbm [shape: f32[2,32,160], index: 3, kind: input, shape index: {}]
  %s4 = inlined_call_operand.vmem [shape: s8[2,160], index: 4, kind: input, shape index: {}]
  %s5 = inlined_call_operand.vmem [shape: f32[2,1], index: 5, kind: output, shape index: {}]
  %s6 = sld [smem:[#allocation0]]
  $region42: #{tpu_custom_call.1} parent=0
    _
  %s8 = ssub.s32 1, %s6
  %s9 = scalar_select 0, %s8, %s6
  $region1: #{tpu_custom_call.1} parent=0
    #allocation2 [shape = 'u8[65536]{0}', space=vmem, size = 0x10000, scoped, tag = 'input window, operand 1, single buffered']
    #allocation3 [shape = 's32[1]{0}', space=sflag, size = 0x4, scoped, tag = 'scoped memory for tpu_custom_call.1']
    #allocation4 [shape = 'u8[65536]{0}', space=vmem, size = 0x10000, scoped, tag = 'input window, operand 2, single buffered']
    #allocation5 [shape = 's32[1]{0}', space=sflag, size = 0x4, scoped, tag = 'scoped memory for tpu_custom_call.1']
    #allocation6 [shape = 'u8[65536]{0}', space=vmem, size = 0x10000, scoped, tag = 'input window, operand 3, single buffered']
    %10 = vsyncpa [#allocation3], 0
    %11 = vsyncpa [#allocation5], 0
    // Predicated region
    $region2: #{tpu_custom_call.1} parent=1 // pred_check
      _
    $region3: #{tpu_custom_call.1} parent=1 // pred_check_branch
      %13 = sbr.rel (0) target = $region5
    $region4: #{tpu_custom_call.1} parent=1 // pred_region
      _
    $region5: #{tpu_custom_call.1} parent=1 // pred_fallthru
      _
    // Predicated region
    $region6: #{tpu_custom_call.1} parent=1 // pred_check
      _
    $region7: #{tpu_custom_call.1} parent=1 // pred_check_branch
      %15 = sbr.rel (0) target = $region9
    $region8: #{tpu_custom_call.1} parent=1 // pred_region
      %s17 = ssub.s32 2048, 2048
      %18 = vsyncadd [#allocation3], %s17
      %s19 = sshll.u32 [#allocation2], 4
      %s20 = int_to_ptr.vmem [resolvable:$true] %s19
      %25 = dma.hbm_to_vmem [thread:$0]  %s1, 2048, %s20, [#allocation3], 256, 256, 16
    $region9: #{tpu_custom_call.1} parent=1 // pred_fallthru
      _
    // Predicated region
    $region10: #{tpu_custom_call.1} parent=1 // pred_check
      _
    $region11: #{tpu_custom_call.1} parent=1 // pred_check_branch
      %27 = sbr.rel (0) target = $region13
    $region12: #{tpu_custom_call.1} parent=1 // pred_region
      %s29 = ssub.s32 2048, 2048
      %30 = vsyncadd [#allocation5], %s29
      %s31 = sshll.u32 [#allocation4], 4
      %s32 = int_to_ptr.vmem [resolvable:$true] %s31
      %37 = dma.hbm_to_vmem [thread:$0]  %s2, 2048, %s32, [#allocation5], 256, 256, 16
    $region13: #{tpu_custom_call.1} parent=1 // pred_fallthru
      _
    // Predicated region
    $region14: #{tpu_custom_call.1} parent=1 // pred_check
      _
    $region15: #{tpu_custom_call.1} parent=1 // pred_check_branch
      %39 = sbr.rel (0) target = $region17
    $region16: #{tpu_custom_call.1} parent=1 // pred_region
      %s41 = ssub.s32 2048, 2048
      %42 = vsyncadd [#allocation5], %s41
      %s43 = sshll.u32 [#allocation6], 4
      %s44 = int_to_ptr.vmem [resolvable:$true] %s43
      %49 = dma.hbm_to_vmem [thread:$0]  %s3, 2048, %s44, [#allocation5], 256, 256, 16
    $region17: #{tpu_custom_call.1} parent=1 // pred_fallthru
      _
    // Predicated region
    $region18: #{tpu_custom_call.1} parent=1 // pred_check
      _
    $region19: #{tpu_custom_call.1} parent=1 // pred_check_branch
      %51 = sbr.rel (0) target = $region21
    $region20: #{tpu_custom_call.1} parent=1 // pred_region
      _
    $region21: #{tpu_custom_call.1} parent=1 // pred_fallthru
      _
    // Predicated region
    $region22: #{tpu_custom_call.1} parent=1 // pred_check
      _
    $region23: #{tpu_custom_call.1} parent=1 // pred_check_branch
      %53 = sbr.rel (0) target = $region25
    $region24: #{tpu_custom_call.1} parent=1 // pred_region
      %54 = dma.done [#allocation3], 2048
    $region25: #{tpu_custom_call.1} parent=1 // pred_fallthru
      _
    // Predicated region
    $region26: #{tpu_custom_call.1} parent=1 // pred_check
      _
    $region27: #{tpu_custom_call.1} parent=1 // pred_check_branch
      %56 = sbr.rel (0) target = $region29
    $region28: #{tpu_custom_call.1} parent=1 // pred_region
      %57 = dma.done [#allocation5], 2048
    $region29: #{tpu_custom_call.1} parent=1 // pred_fallthru
      _
    // Predicated region
    $region30: #{tpu_custom_call.1} parent=1 // pred_check
      _
    $region31: #{tpu_custom_call.1} parent=1 // pred_check_branch
      %59 = sbr.rel (0) target = $region33
    $region32: #{tpu_custom_call.1} parent=1 // pred_region
      %60 = dma.done [#allocation5], 2048
    $region33: #{tpu_custom_call.1} parent=1 // pred_fallthru
      _
    %v63 = vld [vmem:[%s0] sm:$0xff]
    %v64 = vld [vmem:[%s0 + $0x8] sm:$0xff]
    %v65 = vld [vmem:[%s0 + $0x10] sm:$0xff]
    %v66 = vld [vmem:[%s0 + $0x18] sm:$0xff]
    %v67 = vld [vmem:[%s0 + $0x20] sm:$0xff]
    %v68 = vld [vmem:[%s0 + $0x28] sm:$0xff]
    %v69 = vld [vmem:[%s0 + $0x30] sm:$0xff]
    %v70 = vld [vmem:[%s0 + $0x38] sm:$0xff]
    %v71 = vld [vmem:[%s0 + $0x40] sm:$0xff]
    %v72 = vld [vmem:[%s0 + $0x48] sm:$0xff]
    %v73 = vld [vmem:[%s0 + $0x50] sm:$0xff]
    %v74 = vld [vmem:[%s0 + $0x58] sm:$0xff]
    %v75 = vld [vmem:[#allocation2] sm:$0xff]
    %v76 = vld [vmem:[#allocation2 + $0x8] sm:$0xff]
    %v77 = vld [vmem:[#allocation2 + $0x10] sm:$0xff]
    %v78 = vld [vmem:[#allocation2 + $0x18] sm:$0xff]
    %v79 = vld [vmem:[#allocation2 + $0x20] sm:$0xff]
    %v80 = vld [vmem:[#allocation2 + $0x28] sm:$0xff]
    %v81 = vld [vmem:[#allocation2 + $0x30] sm:$0xff]
    %v82 = vld [vmem:[#allocation2 + $0x38] sm:$0xff]
    %v83 = vld [vmem:[#allocation2 + $0x40] sm:$0xff]
    %v84 = vld [vmem:[#allocation2 + $0x48] sm:$0xff]
    %v85 = vld [vmem:[#allocation2 + $0x50] sm:$0xff]
    %v86 = vld [vmem:[#allocation2 + $0x58] sm:$0xff]
    %v87 = vld [vmem:[#allocation2 + $0x60] sm:$0xff]
    %v88 = vld [vmem:[#allocation2 + $0x68] sm:$0xff]
    %v89 = vld [vmem:[#allocation2 + $0x70] sm:$0xff]
    %v90 = vld [vmem:[#allocation2 + $0x78] sm:$0xff]
    %92 = vset.pattern.permute.xlu0 0
    %93 = vperm.xlu0 %92, %v63
    %v94 = vpop.permute.xlu0 %93
    %97 = vset.pattern.permute.xlu0 0
    %98 = vperm.xlu0 %97, %v64
    %v99 = vpop.permute.xlu0 %98
    %102 = vset.pattern.permute.xlu0 0
    %103 = vperm.xlu0 %102, %v65
    %v104 = vpop.permute.xlu0 %103
    %107 = vset.pattern.permute.xlu0 0
    %108 = vperm.xlu0 %107, %v66
    %v109 = vpop.permute.xlu0 %108
    %v111 = vmul.f32 %v75, %v94
    %v112 = vmul.f32 %v76, %v94
    %v113 = vmul.f32 %v77, %v99
    %v114 = vmul.f32 %v78, %v99
    %v115 = vmul.f32 %v79, %v104
    %v116 = vmul.f32 %v80, %v104
    %v117 = vmul.f32 %v81, %v109
    %v118 = vmul.f32 %v82, %v109
    %v119 = vmul.f32 %v83, %v94
    %v120 = vmul.f32 %v84, %v94
    %v121 = vmul.f32 %v85, %v99
    %v122 = vmul.f32 %v86, %v99
    %v123 = vmul.f32 %v87, %v104
    %v124 = vmul.f32 %v88, %v104
    %v125 = vmul.f32 %v89, %v109
    %v126 = vmul.f32 %v90, %v109
    %v127 = vadd.f32 %v111, %v113
    %v128 = vadd.f32 %v127, %v115
    %v129 = vadd.f32 %v128, %v117
    %v130 = vrot.slane %v129, 4
    %v131 = vadd.f32 %v129, %v130
    %v132 = vrot.slane %v131, 2
    %v133 = vadd.f32 %v131, %v132
    %v134 = vrot.slane %v133, 1
    %v135 = vadd.f32 %v133, %v134
    %vm136 = vcmask 261120
    %v137 = vsel %vm136, %v112, 0.0
    %v138 = vsel %vm136, %v114, 0.0
    %v139 = vadd.f32 %v137, %v138
    %v140 = vsel %vm136, %v116, 0.0
    %v141 = vadd.f32 %v139, %v140
    %v142 = vsel %vm136, %v118, 0.0
    %v143 = vadd.f32 %v141, %v142
    %v144 = vrot.slane %v143, 4
    %v145 = vadd.f32 %v143, %v144
    %v146 = vrot.slane %v145, 2
    %v147 = vadd.f32 %v145, %v146
    %v148 = vrot.slane %v147, 1
    %v149 = vadd.f32 %v147, %v148
    %v150 = vadd.f32 %v119, %v121
    %v151 = vadd.f32 %v150, %v123
    %v152 = vadd.f32 %v151, %v125
    %v153 = vrot.slane %v152, 4
    %v154 = vadd.f32 %v152, %v153
    %v155 = vrot.slane %v154, 2
    %v156 = vadd.f32 %v154, %v155
    %v157 = vrot.slane %v156, 1
    %v158 = vadd.f32 %v156, %v157
    %v159 = vsel %vm136, %v120, 0.0
    %v160 = vsel %vm136, %v122, 0.0
    %v161 = vadd.f32 %v159, %v160
    %v162 = vsel %vm136, %v124, 0.0
    %v163 = vadd.f32 %v161, %v162
    %v164 = vsel %vm136, %v126, 0.0
    %v165 = vadd.f32 %v163, %v164
    %v166 = vrot.slane %v165, 4
    %v167 = vadd.f32 %v165, %v166
    %v168 = vrot.slane %v167, 2
    %v169 = vadd.f32 %v167, %v168
    %v170 = vrot.slane %v169, 1
    %v171 = vadd.f32 %v169, %v170
    %v172 = vld [vmem:[#allocation4] sm:$0xff]
    %v173 = vld [vmem:[#allocation4 + $0x8] sm:$0xff]
    %v174 = vld [vmem:[#allocation4 + $0x10] sm:$0xff]
    %v175 = vld [vmem:[#allocation4 + $0x18] sm:$0xff]
    %v176 = vld [vmem:[#allocation4 + $0x20] sm:$0xff]
    %v177 = vld [vmem:[#allocation4 + $0x28] sm:$0xff]
    %v178 = vld [vmem:[#allocation4 + $0x30] sm:$0xff]
    %v179 = vld [vmem:[#allocation4 + $0x38] sm:$0xff]
    %v180 = vld [vmem:[#allocation4 + $0x40] sm:$0xff]
    %v181 = vld [vmem:[#allocation4 + $0x48] sm:$0xff]
    %v182 = vld [vmem:[#allocation4 + $0x50] sm:$0xff]
    %v183 = vld [vmem:[#allocation4 + $0x58] sm:$0xff]
    %v184 = vld [vmem:[#allocation4 + $0x60] sm:$0xff]
    %v185 = vld [vmem:[#allocation4 + $0x68] sm:$0xff]
    %v186 = vld [vmem:[#allocation4 + $0x70] sm:$0xff]
    %v187 = vld [vmem:[#allocation4 + $0x78] sm:$0xff]
    %189 = vset.pattern.permute.xlu0 0
    %190 = vperm.xlu0 %189, %v67
    %v191 = vpop.permute.xlu0 %190
    %194 = vset.pattern.permute.xlu0 0
    %195 = vperm.xlu0 %194, %v68
    %v196 = vpop.permute.xlu0 %195
    %199 = vset.pattern.permute.xlu0 0
    %200 = vperm.xlu0 %199, %v69
    %v201 = vpop.permute.xlu0 %200
    %204 = vset.pattern.permute.xlu0 0
    %205 = vperm.xlu0 %204, %v70
    %v206 = vpop.permute.xlu0 %205
    %v208 = vmul.f32 %v172, %v191
    %v209 = vmul.f32 %v173, %v191
    %v210 = vmul.f32 %v174, %v196
    %v211 = vmul.f32 %v175, %v196
    %v212 = vmul.f32 %v176, %v201
    %v213 = vmul.f32 %v177, %v201
    %v214 = vmul.f32 %v178, %v206
    %v215 = vmul.f32 %v179, %v206
    %v216 = vmul.f32 %v180, %v191
    %v217 = vmul.f32 %v181, %v191
    %v218 = vmul.f32 %v182, %v196
    %v219 = vmul.f32 %v183, %v196
    %v220 = vmul.f32 %v184, %v201
    %v221 = vmul.f32 %v185, %v201
    %v222 = vmul.f32 %v186, %v206
    %v223 = vmul.f32 %v187, %v206
    %v224 = vadd.f32 %v208, %v210
    %v225 = vadd.f32 %v224, %v212
    %v226 = vadd.f32 %v225, %v214
    %v227 = vrot.slane %v226, 4
    %v228 = vadd.f32 %v226, %v227
    %v229 = vrot.slane %v228, 2
    %v230 = vadd.f32 %v228, %v229
    %v231 = vrot.slane %v230, 1
    %v232 = vadd.f32 %v230, %v231
    %v233 = vsel %vm136, %v209, 0.0
    %v234 = vsel %vm136, %v211, 0.0
    %v235 = vadd.f32 %v233, %v234
    %v236 = vsel %vm136, %v213, 0.0
    %v237 = vadd.f32 %v235, %v236
    %v238 = vsel %vm136, %v215, 0.0
    %v239 = vadd.f32 %v237, %v238
    %v240 = vrot.slane %v239, 4
    %v241 = vadd.f32 %v239, %v240
    %v242 = vrot.slane %v241, 2
    %v243 = vadd.f32 %v241, %v242
    %v244 = vrot.slane %v243, 1
    %v245 = vadd.f32 %v243, %v244
    %v246 = vadd.f32 %v216, %v218
    %v247 = vadd.f32 %v246, %v220
    %v248 = vadd.f32 %v247, %v222
    %v249 = vrot.slane %v248, 4
    %v250 = vadd.f32 %v248, %v249
    %v251 = vrot.slane %v250, 2
    %v252 = vadd.f32 %v250, %v251
    %v253 = vrot.slane %v252, 1
    %v254 = vadd.f32 %v252, %v253
    %v255 = vsel %vm136, %v217, 0.0
    %v256 = vsel %vm136, %v219, 0.0
    %v257 = vadd.f32 %v255, %v256
    %v258 = vsel %vm136, %v221, 0.0
    %v259 = vadd.f32 %v257, %v258
    %v260 = vsel %vm136, %v223, 0.0
    %v261 = vadd.f32 %v259, %v260
    %v262 = vrot.slane %v261, 4
    %v263 = vadd.f32 %v261, %v262
    %v264 = vrot.slane %v263, 2
    %v265 = vadd.f32 %v263, %v264
    %v266 = vrot.slane %v265, 1
    %v267 = vadd.f32 %v265, %v266
    %v268 = vadd.f32 %v135, %v232
    %v269 = vadd.f32 %v149, %v245
    %v270 = vadd.f32 %v158, %v254
    %v271 = vadd.f32 %v171, %v267
    %v272 = vld [vmem:[#allocation6] sm:$0xff]
    %v273 = vld [vmem:[#allocation6 + $0x8] sm:$0xff]
    %v274 = vld [vmem:[#allocation6 + $0x10] sm:$0xff]
    %v275 = vld [vmem:[#allocation6 + $0x18] sm:$0xff]
    %v276 = vld [vmem:[#allocation6 + $0x20] sm:$0xff]
    %v277 = vld [vmem:[#allocation6 + $0x28] sm:$0xff]
    %v278 = vld [vmem:[#allocation6 + $0x30] sm:$0xff]
    %v279 = vld [vmem:[#allocation6 + $0x38] sm:$0xff]
    %v280 = vld [vmem:[#allocation6 + $0x40] sm:$0xff]
    %v281 = vld [vmem:[#allocation6 + $0x48] sm:$0xff]
    %v282 = vld [vmem:[#allocation6 + $0x50] sm:$0xff]
    %v283 = vld [vmem:[#allocation6 + $0x58] sm:$0xff]
    %v284 = vld [vmem:[#allocation6 + $0x60] sm:$0xff]
    %v285 = vld [vmem:[#allocation6 + $0x68] sm:$0xff]
    %v286 = vld [vmem:[#allocation6 + $0x70] sm:$0xff]
    %v287 = vld [vmem:[#allocation6 + $0x78] sm:$0xff]
    %289 = vset.pattern.permute.xlu0 0
    %290 = vperm.xlu0 %289, %v71
    %v291 = vpop.permute.xlu0 %290
    %294 = vset.pattern.permute.xlu0 0
    %295 = vperm.xlu0 %294, %v72
    %v296 = vpop.permute.xlu0 %295
    %299 = vset.pattern.permute.xlu0 0
    %300 = vperm.xlu0 %299, %v73
    %v301 = vpop.permute.xlu0 %300
    %304 = vset.pattern.permute.xlu0 0
    %305 = vperm.xlu0 %304, %v74
    %v306 = vpop.permute.xlu0 %305
    %v308 = vmul.f32 %v272, %v291
    %v309 = vmul.f32 %v273, %v291
    %v310 = vmul.f32 %v274, %v296
    %v311 = vmul.f32 %v275, %v296
    %v312 = vmul.f32 %v276, %v301
    %v313 = vmul.f32 %v277, %v301
    %v314 = vmul.f32 %v278, %v306
    %v315 = vmul.f32 %v279, %v306
    %v316 = vmul.f32 %v280, %v291
    %v317 = vmul.f32 %v281, %v291
    %v318 = vmul.f32 %v282, %v296
    %v319 = vmul.f32 %v283, %v296
    %v320 = vmul.f32 %v284, %v301
    %v321 = vmul.f32 %v285, %v301
    %v322 = vmul.f32 %v286, %v306
    %v323 = vmul.f32 %v287, %v306
    %v324 = vadd.f32 %v308, %v310
    %v325 = vadd.f32 %v324, %v312
    %v326 = vadd.f32 %v325, %v314
    %v327 = vrot.slane %v326, 4
    %v328 = vadd.f32 %v326, %v327
    %v329 = vrot.slane %v328, 2
    %v330 = vadd.f32 %v328, %v329
    %v331 = vrot.slane %v330, 1
    %v332 = vadd.f32 %v330, %v331
    %v333 = vsel %vm136, %v309, 0.0
    %v334 = vsel %vm136, %v311, 0.0
    %v335 = vadd.f32 %v333, %v334
    %v336 = vsel %vm136, %v313, 0.0
    %v337 = vadd.f32 %v335, %v336
    %v338 = vsel %vm136, %v315, 0.0
    %v339 = vadd.f32 %v337, %v338
    %v340 = vrot.slane %v339, 4
    %v341 = vadd.f32 %v339, %v340
    %v342 = vrot.slane %v341, 2
    %v343 = vadd.f32 %v341, %v342
    %v344 = vrot.slane %v343, 1
    %v345 = vadd.f32 %v343, %v344
    %v346 = vadd.f32 %v316, %v318
    %v347 = vadd.f32 %v346, %v320
    %v348 = vadd.f32 %v347, %v322
    %v349 = vrot.slane %v348, 4
    %v350 = vadd.f32 %v348, %v349
    %v351 = vrot.slane %v350, 2
    %v352 = vadd.f32 %v350, %v351
    %v353 = vrot.slane %v352, 1
    %v354 = vadd.f32 %v352, %v353
    %v355 = vsel %vm136, %v317, 0.0
    %v356 = vsel %vm136, %v319, 0.0
    %v357 = vadd.f32 %v355, %v356
    %v358 = vsel %vm136, %v321, 0.0
    %v359 = vadd.f32 %v357, %v358
    %v360 = vsel %vm136, %v323, 0.0
    %v361 = vadd.f32 %v359, %v360
    %v362 = vrot.slane %v361, 4
    %v363 = vadd.f32 %v361, %v362
    %v364 = vrot.slane %v363, 2
    %v365 = vadd.f32 %v363, %v364
    %v366 = vrot.slane %v365, 1
    %v367 = vadd.f32 %v365, %v366
    %v368 = vadd.f32 %v268, %v332
    %v369 = vadd.f32 %v269, %v345
    %v370 = vadd.f32 %v270, %v354
    %v371 = vadd.f32 %v271, %v367
    %v372 = vld [vmem:[%s4] sm:$0x3]
    %vm373 = vnez %v372
    %v374 = vsel %vm373, 16843009, 0
    %v376 = vshrl.u32 %v374, 8
    %vm378 = vnez %v374
    %vm379 = vnez %v376
    %v380 = vsel %vm378, 16843009, 0
    %v381 = vsel %vm379, 16843009, 0
    %v382 = vunpack.c.0.s8 %v380
    %v383 = vunpack.c.0.s8 %v381
    %vm384 = vcmp.ne.s32.totalorder %v382, 0
    %vm385 = vcmp.ne.s32.totalorder %v383, 0
    %v386 = vsel %vm384, 1, 0
    %v387 = vsel %vm385, 1, 0
    %v388 = vlaneseq
    %v389 = vshrl.u32 %v388, 7
    %v390 = vsub.s32 0, %v389
    %v391 = vrot.slane %v386, %v390
    %v392 = vlaneseq
    %v393 = vshrl.u32 %v392, 7
    %v394 = vsub.s32 4, %v393
    %v395 = vrot.slane %v386, %v394
    %v396 = vlaneseq
    %v397 = vshrl.u32 %v396, 7
    %v398 = vsub.s32 0, %v397
    %v399 = vrot.slane %v387, %v398
    %v400 = vlaneseq
    %v401 = vshrl.u32 %v400, 7
    %v402 = vsub.s32 4, %v401
    %v403 = vrot.slane %v387, %v402
    %vm404 = vcmp.ne.s32.totalorder %v391, 0
    %vm405 = vcmp.ne.s32.totalorder %v395, 0
    %vm406 = vcmp.ne.s32.totalorder %v399, 0
    %vm407 = vcmp.ne.s32.totalorder %v403, 0
    %v408 = vsel %vm404, %v368, -1e+30
    %v409 = vsel %vm405, %v369, -1e+30
    %v410 = vsel %vm406, %v370, -1e+30
    %v411 = vsel %vm407, %v371, -1e+30
    %vm416 = vcmask 1041409
    %v417 = vsel %vm416, %v410, %v408
    %v418 = vsel %vm416, %v411, %v409
    %vm421 = vcmask 1041408
    %v422 = vsel %vm421, %v417, -inf
    %vm423 = vcmask 254976
    %v424 = vsel %vm423, %v418, -inf
    %v425 = vmax.f32 %v422, %v424
    %426 = vmax.xlane.f32.xlu0 %v425
    %v427 = vpop.xlane.xlu0 %426
    %v429 = vrot.slane %v427, 1
    %v432 = vsub.f32 %v408, %v427
    %v433 = vsub.f32 %v409, %v427
    %v434 = vsub.f32 %v410, %v429
    %v435 = vsub.f32 %v411, %v429
    %v436 = vmul.f32 %v432, 1.442695
    %v437 = vpow.pop %v436
    %v438 = vmul.f32 %v433, 1.442695
    %v439 = vpow.pop %v438
    %v440 = vmul.f32 %v434, 1.442695
    %v441 = vpow.pop %v440
    %v442 = vmul.f32 %v435, 1.442695
    %v443 = vpow.pop %v442
    %v448 = vrot.slane %v441, 7
    %v449 = vsel %vm416, %v448, %v437
    %v450 = vrot.slane %v443, 7
    %v451 = vsel %vm416, %v450, %v439
    %v454 = vsel %vm421, %v449, 0.0
    %v455 = vsel %vm423, %v451, 0.0
    %v456 = vadd.f32 %v454, %v455
    %457 = vadd.xlane.f32.xlu0 %v456
    %v458 = vpop.xlane.xlu0 %457
    %v459 = vsub.f32 1.0, %v437
    %v460 = vsub.f32 1.0, %v441
    %v462 = vrot.slane %v458, 1
    %v465 = vrcp.pop %v458
    %v466 = vmul.f32 %v459, %v465
    %v467 = vrcp.pop %v462
    %v468 = vmul.f32 %v460, %v467
    %v471 = vrot.slane %v468, 7
    %v472 = vsel %vm416, %v471, %v466
    %vm474 = vcmask 1024
    %475 = vst.msk [vmem:[%s5] sm:$0x3] %vm474, %v472
    // Predicated region
    $region34: #{tpu_custom_call.1} parent=1 // pred_check
      _
    $region35: #{tpu_custom_call.1} parent=1 // pred_check_branch
      %477 = sbr.rel (0) target = $region37
    $region36: #{tpu_custom_call.1} parent=1 // pred_region
      _
    $region37: #{tpu_custom_call.1} parent=1 // pred_fallthru
      _
    // Predicated region
    $region38: #{tpu_custom_call.1} parent=1 // pred_check
      _
    $region39: #{tpu_custom_call.1} parent=1 // pred_check_branch
      %479 = sbr.rel (0) target = $region41
    $region40: #{tpu_custom_call.1} parent=1 // pred_region
      _
    $region41: #{tpu_custom_call.1} parent=1 // pred_fallthru
      _
    %480 = vsyncpa [#allocation3], 1
    %481 = vsyncpa [#allocation5], 1

</llo_original>
